<compile_context>
chip_gen: v5e
topology: v5e:2x2
jax: 0.10.0
libtpu: 0.0.40
codegen_flags: <defaults>
</compile_context>

<pallas_src>
import jax
import jax.numpy as jnp
from jax.experimental import pallas as pl
from jax.experimental.pallas import tpu as pltpu


def _round_up(x, m):
    return (x + m - 1) // m * m


def _tensorcores_per_device():
    """Best-effort count of TensorCores presented as a single (megacore) device.

    Only affects tile sizing (perf), never correctness."""
    try:
        kind = jax.devices()[0].device_kind.lower()
    except Exception:
        return 1
    if "7" in kind:                                   # v7x: 2 TCs per device
        return 2
    if "v4" in kind or kind.strip() in ("tpu v5", "tpu v5p"):  # megacore gens
        return 2
    return 1                                          # v5e / v6e: single TC


def ae_fused_kernel(x_ref, w_ref, b_ref, o_ref):
    # One MXU matmul + bias add per batch tile.
    o_ref[...] = (
        jnp.dot(
            x_ref[...],
            w_ref[...],
            preferred_element_type=jnp.float32,
            precision=jax.lax.Precision.HIGHEST,
        )
        + b_ref[...]
    ).astype(o_ref.dtype)


def init_ae_params(key, input_dim, latent_dim, dtype=jnp.float32):
    """Mirror the PyTorch module's layer shapes / default Linear init.

    Returns a list of (W, b) with W stored pre-transposed as
    (in_features, out_features) and b as (1, out_features)."""
    middle = latent_dim
    layer_dims = [
        (input_dim, middle),   # encode_layer1
        (middle, middle),      # encode_layer2
        (middle, latent_dim),  # encode_layer3
        (latent_dim, middle),  # decode_layer1
        (middle, middle),      # decode_layer2
        (middle, input_dim),   # decode_layer3
    ]
    params = []
    for fan_in, fan_out in layer_dims:
        key, kw, kb = jax.random.split(key, 3)
        bound = 1.0 / float(fan_in) ** 0.5
        w = jax.random.uniform(kw, (fan_in, fan_out), dtype, -bound, bound)
        b = jax.random.uniform(kb, (1, fan_out), dtype, -bound, bound)
        params.append((w, b))
    return params


def fold_ae_params(params):
    """Collapse the activation-free 6-layer chain into one affine map.

    y = (((x W1 + b1) W2 + b2) ... ) W6 + b6  ==  x @ W_eff + b_eff.
    Done once per parameter set (outside the kernel) at HIGHEST precision so
    the fold adds no meaningful rounding.  No column padding: the kernel
    writes the true out_dim directly (masked stores are fine here)."""
    hi = jax.lax.Precision.HIGHEST
    w_eff, b_eff = params[0]
    for w, b in params[1:]:
        w_eff = jnp.dot(w_eff, w, precision=hi)
        b_eff = jnp.dot(b_eff, w, precision=hi) + b
    return w_eff, b_eff


def ae_forward(x, folded, *, tile_rows=None, out_dtype=None):
    """Apply the folded AE with a batch-tiled Pallas call.

    No input padding and no output slicing: the pallas_call output is the
    exact (batch, out_dim) result of the module's forward pass."""
    w_eff, b_eff = folded
    batch, in_dim = x.shape
    k_dim, out_dim = w_eff.shape
    assert in_dim == k_dim, (in_dim, k_dim)
    # Optional bf16 output halves writeback bytes if the consumer tolerates it;
    # default keeps the module's f32 output dtype.
    out_dtype = x.dtype if out_dtype is None else out_dtype

    if tile_rows is None:
        n_tc = _tensorcores_per_device()
        if n_tc >= 2 and batch >= 16:
            # Two balanced tiles -> both TensorCores of a megacore device do
            # (nearly) equal work; any edge block uses masked boundary access.
            tile_rows = _round_up(pl.cdiv(batch, n_tc), 8)
        else:
            # Single grid step; block shape == full array dims, so no (8,128)
            # constraint, no padding, no boundary masking.
            tile_rows = batch
    assert tile_rows == batch or tile_rows % 8 == 0, (
        "tile_rows must be a multiple of 8 or equal to the batch size")

    num_tiles = pl.cdiv(batch, tile_rows)

    return pl.pallas_call(
        ae_fused_kernel,
        out_shape=jax.ShapeDtypeStruct((batch, out_dim), out_dtype),
        grid=(num_tiles,),
        in_specs=[
            pl.BlockSpec((tile_rows, in_dim), lambda i: (i, 0)),  # x: batch-tiled
            pl.BlockSpec((in_dim, out_dim), lambda i: (0, 0)),    # W_eff: resident
            pl.BlockSpec((1, out_dim), lambda i: (0, 0)),         # b_eff: resident
        ],
        out_specs=pl.BlockSpec((tile_rows, out_dim), lambda i: (i, 0)),
        compiler_params=pltpu.CompilerParams(
            dimension_semantics=("parallel",)),
    )(x, w_eff, b_eff)


def ae_reference(x, params):
    """Literal sequential 6-layer chain (the module semantics)."""
    hi = jax.lax.Precision.HIGHEST
    h = x
    for w, b in params:
        h = jnp.dot(h, w, precision=hi) + b
    return h


if __name__ == "__main__":
    key = jax.random.PRNGKey(0)
    key, kx, kp = jax.random.split(key, 3)

    input_dim = 64
    latent_dim = 32
    params = init_ae_params(kp, input_dim, latent_dim)
    folded = fold_ae_params(params)          # once per parameter set
    w_eff, b_eff = folded
    hi = jax.lax.Precision.HIGHEST

    # (batch, forced tile_rows):
    #   (8,   None) -> tiny batch, single full-array tile
    #   (37,  None) -> non-multiple-of-8 batch
    #   (300, None) -> generation-dependent default tiling (1 or 2 tiles)
    #   (300, 152)  -> forced two-tile path; exercises edge-block masking on any chip
    cases = [(8, None), (37, None), (300, None), (300, 152)]
    for salt, (batch, tile_rows) in enumerate(cases, start=1):
        xb = jax.random.normal(jax.random.fold_in(kx, salt),
                               (batch, input_dim), jnp.float32)
        out = jax.block_until_ready(ae_forward(xb, folded, tile_rows=tile_rows))
        assert out.shape == (batch, input_dim), out.shape

        # Same fused affine map evaluated in plain JAX at matching precision.
        ref_fused = jnp.dot(xb, w_eff, precision=hi) + b_eff
        assert jnp.allclose(out, ref_fused, atol=1e-4, rtol=1e-4), \
            f"mismatch vs fused reference (batch={batch}, tile_rows={tile_rows})"

        # Literal 6-layer chain at HIGHEST precision; only fold reassociation
        # separates it from the kernel result.
        ref_chain = ae_reference(xb, params)
        assert jnp.allclose(out, ref_chain, atol=2e-3, rtol=2e-3), \
            f"mismatch vs sequential-chain reference (batch={batch}, tile_rows={tile_rows})"

    print("KERNEL_OK")
</pallas_src>

<mosaic_0001>
module attributes {stable_mosaic.version = 11 : i64} {
  func.func @ae_fused_kernel(%arg0: i32, %arg1: memref<8x64xf32, #tpu.memory_space<vmem>>, %arg2: memref<64x64xf32, #tpu.memory_space<vmem>>, %arg3: memref<1x64xf32, #tpu.memory_space<vmem>>, %arg4: memref<8x64xf32, #tpu.memory_space<vmem>>) attributes {dimension_semantics = [#tpu.dimension_semantics<parallel>], iteration_bounds = array<i64: 1>, scalar_prefetch = 0 : i64, scratch_operands = 0 : i64, tpu.core_type = #tpu.core_type<tc>, window_params = [{transform_indices = @transform_0, window_bounds = array<i64: 8, 64>}, {pipeline_mode = #tpu.pipeline_mode<synchronous>, transform_indices = @transform_1, window_bounds = array<i64: 64, 64>}, {pipeline_mode = #tpu.pipeline_mode<synchronous>, transform_indices = @transform_2, window_bounds = array<i64: 1, 64>}, {transform_indices = @transform_3, window_bounds = array<i64: 8, 64>}]} {
    %c0 = arith.constant 0 : index
    %c0_0 = arith.constant 0 : index
    %0 = vector.load %arg1[%c0, %c0_0] : memref<8x64xf32, #tpu.memory_space<vmem>>, vector<8x64xf32>
    %c0_1 = arith.constant 0 : index
    %c0_2 = arith.constant 0 : index
    %1 = vector.load %arg2[%c0_1, %c0_2] : memref<64x64xf32, #tpu.memory_space<vmem>>, vector<64x64xf32>
    %cst = arith.constant dense<0.000000e+00> : vector<8x64xf32>
    %2 = tpu.matmul %0, %1, %cst {dimension_numbers = #tpu.dot_dimension_numbers<[1], [0], [0], [1], [0, 0, 1, 1], [], []>, precision = #tpu.contract_precision<fp32>} : vector<8x64xf32>, vector<64x64xf32>, vector<8x64xf32> -> vector<8x64xf32>
    %c0_3 = arith.constant 0 : index
    %c0_4 = arith.constant 0 : index
    %3 = vector.load %arg3[%c0_3, %c0_4] : memref<1x64xf32, #tpu.memory_space<vmem>>, vector<1x64xf32>
    %4 = vector.broadcast %3 : vector<1x64xf32> to vector<8x64xf32>
    %5 = arith.addf %2, %4 : vector<8x64xf32>
    %c0_5 = arith.constant 0 : index
    %c0_6 = arith.constant 0 : index
    %6 = vector.load %arg4[%c0_5, %c0_6] : memref<8x64xf32, #tpu.memory_space<vmem>>, vector<8x64xf32>
    tpu.vector_store %arg4[%c0_5, %c0_6], %5 {strides = array<i32>} : memref<8x64xf32, #tpu.memory_space<vmem>>, vector<8x64xf32>,
    return
  }
  func.func @transform_0(%arg0: i32) -> (i32, i32) {
    %c0_i32 = arith.constant 0 : i32
    %c0_i32_0 = arith.constant 0 : i32
    return %arg0, %c0_i32 : i32, i32
  }
  func.func @transform_1(%arg0: i32) -> (i32, i32) {
    %c0_i32 = arith.constant 0 : i32
    %c0_i32_0 = arith.constant 0 : i32
    %c0_i32_1 = arith.constant 0 : i32
    return %c0_i32, %c0_i32_0 : i32, i32
  }
  func.func @transform_2(%arg0: i32) -> (i32, i32) {
    %c0_i32 = arith.constant 0 : i32
    %c0_i32_0 = arith.constant 0 : i32
    %c0_i32_1 = arith.constant 0 : i32
    return %c0_i32, %c0_i32_0 : i32, i32
  }
  func.func @transform_3(%arg0: i32) -> (i32, i32) {
    %c0_i32 = arith.constant 0 : i32
    %c0_i32_0 = arith.constant 0 : i32
    return %arg0, %c0_i32 : i32, i32
  }
}

</mosaic_0001>

<llo_original>
// kernel: tpu_custom_call.1
$region0: #{tpu_custom_call.1}
  #allocation0 [shape = 'u32[]', space=smem, size = 0x4, offset = 0x4, fixed_abs, tag = 'smem constant byte address 0x4 - core index']
  #allocation1 [shape = 'u32[72,128]{1,0:T(1,128)}', space=vmem, size = 0x9000, scoped, tag = 'internal scratch']
  %s0 = inlined_call_operand.hbm [shape: f32[8,64], index: 0, kind: input, shape index: {}]
  %s1 = inlined_call_operand.hbm [shape: f32[64,64], index: 1, kind: input, shape index: {}]
  %s2 = inlined_call_operand.vmem [shape: f32[1,64], index: 2, kind: input, shape index: {}]
  %s3 = inlined_call_operand.hbm [shape: f32[8,64], index: 3, kind: output, shape index: {}]
  %s4 = sld [smem:[#allocation0]]
  $region30: #{tpu_custom_call.1} parent=0
    _
  %s6 = ssub.s32 1, %s4
  %s7 = scalar_select 0, %s6, %s4
  $region1: #{tpu_custom_call.1} parent=0
    #allocation2 [shape = 'u8[4096]{0}', space=vmem, size = 0x1000, scoped, tag = 'input window, operand 0, single buffered']
    #allocation3 [shape = 's32[1]{0}', space=sflag, size = 0x4, scoped, tag = 'scoped memory for tpu_custom_call.1']
    #allocation4 [shape = 's32[1]{0}', space=sflag, size = 0x4, scoped, tag = 'scoped memory for tpu_custom_call.1']
    #allocation5 [shape = 'u8[32768]{0}', space=vmem, size = 0x8000, scoped, tag = 'input window, operand 1, single buffered']
    #allocation6 [shape = 's32[1]{0}', space=sflag, size = 0x4, scoped, tag = 'scoped memory for tpu_custom_call.1']
    #allocation7 [shape = 'u8[4096]{0}', space=vmem, size = 0x1000, scoped, tag = 'output window, operand 0, single buffered']
    %8 = vsyncpa [#allocation3], 0
    %9 = vsyncpa [#allocation6], 0
    %10 = vsyncpa [#allocation4], 0
    // Predicated region
    $region2: #{tpu_custom_call.1} parent=1 // pred_check
      _
    $region3: #{tpu_custom_call.1} parent=1 // pred_check_branch
      %12 = sbr.rel (0) target = $region5
    $region4: #{tpu_custom_call.1} parent=1 // pred_region
      %14 = vsyncadd [#allocation3], 0
      %s16 = sshll.u32 %s0, 4
      %s17 = int_to_ptr.hbm [resolvable:$true] %s16
      %s18 = sshll.u32 [#allocation2], 4
      %s19 = int_to_ptr.vmem [resolvable:$true] %s18
      %21 = dma.hbm_to_vmem [thread:$0]  %s17, 128, %s19, [#allocation3]
    $region5: #{tpu_custom_call.1} parent=1 // pred_fallthru
      _
    // Predicated region
    $region6: #{tpu_custom_call.1} parent=1 // pred_check
      _
    $region7: #{tpu_custom_call.1} parent=1 // pred_check_branch
      %23 = sbr.rel (0) target = $region9
    $region8: #{tpu_custom_call.1} parent=1 // pred_region
      %25 = vsyncadd [#allocation6], 0
      %s26 = sshll.u32 %s1, 4
      %s27 = int_to_ptr.hbm [resolvable:$true] %s26
      %s28 = sshll.u32 [#allocation5], 4
      %s29 = int_to_ptr.vmem [resolvable:$true] %s28
      %34 = dma.hbm_to_vmem [thread:$0]  %s27, 1024, %s29, [#allocation6], 128, 128, 8
    $region9: #{tpu_custom_call.1} parent=1 // pred_fallthru
      _
    // Predicated region
    $region10: #{tpu_custom_call.1} parent=1 // pred_check
      _
    $region11: #{tpu_custom_call.1} parent=1 // pred_check_branch
      %36 = sbr.rel (0) target = $region13
    $region12: #{tpu_custom_call.1} parent=1 // pred_region
      _
    $region13: #{tpu_custom_call.1} parent=1 // pred_fallthru
      _
    // Predicated region
    $region14: #{tpu_custom_call.1} parent=1 // pred_check
      _
    $region15: #{tpu_custom_call.1} parent=1 // pred_check_branch
      %38 = sbr.rel (0) target = $region17
    $region16: #{tpu_custom_call.1} parent=1 // pred_region
      %40 = dma.done [#allocation3], 128
    $region17: #{tpu_custom_call.1} parent=1 // pred_fallthru
      _
    // Predicated region
    $region18: #{tpu_custom_call.1} parent=1 // pred_check
      _
    $region19: #{tpu_custom_call.1} parent=1 // pred_check_branch
      %42 = sbr.rel (0) target = $region21
    $region20: #{tpu_custom_call.1} parent=1 // pred_region
      %44 = dma.done [#allocation6], 1024
    $region21: #{tpu_custom_call.1} parent=1 // pred_fallthru
      _
    %v45 = vld [vmem:[#allocation2] sm:$0xff]
    %v46 = vld [vmem:[#allocation5] sm:$0xff]
    %v47 = vld [vmem:[#allocation5 + $0x8] sm:$0xff]
    %v48 = vld [vmem:[#allocation5 + $0x10] sm:$0xff]
    %v49 = vld [vmem:[#allocation5 + $0x18] sm:$0xff]
    %v50 = vld [vmem:[#allocation5 + $0x20] sm:$0xff]
    %v51 = vld [vmem:[#allocation5 + $0x28] sm:$0xff]
    %v52 = vld [vmem:[#allocation5 + $0x30] sm:$0xff]
    %v53 = vld [vmem:[#allocation5 + $0x38] sm:$0xff]
    %v54 = vld [vmem:[%s2] sm:$0x1]
    %v56 = vperm.slane %v54, 0
    %vm58 = vcmask 523264
    %v60 = vsel %vm58, %v45, 0
    %62 = vmatpush.msra.mxu0 0.0
    %63 = vmatpush.msra.mxu0 0.0
    %64 = vmatpush.msra.mxu0 0.0
    %65 = vmatpush.msra.mxu0 0.0
    %66 = vmatpush.msra.mxu0 0.0
    %67 = vmatpush.msra.mxu0 0.0
    %68 = vmatpush.msra.mxu0 0.0
    %69 = vmatpush.msra.mxu0 0.0
    %v70 = vand.u32 %v53, 4294901760
    %71 = vmatpush.msra.mxu0 %v70
    %v72 = vand.u32 %v52, 4294901760
    %73 = vmatpush.msra.mxu0 %v72
    %v74 = vand.u32 %v51, 4294901760
    %75 = vmatpush.msra.mxu0 %v74
    %v76 = vand.u32 %v50, 4294901760
    %77 = vmatpush.msra.mxu0 %v76
    %v78 = vand.u32 %v49, 4294901760
    %79 = vmatpush.msra.mxu0 %v78
    %v80 = vand.u32 %v48, 4294901760
    %81 = vmatpush.msra.mxu0 %v80
    %v82 = vand.u32 %v47, 4294901760
    %83 = vmatpush.msra.mxu0 %v82
    %v84 = vand.u32 %v46, 4294901760
    %85 = vmatpush.msra.mxu0 %v84
    %v86 = vand.u32 %v60, 4294901760
    %v87 = vsub.f32 %v60, %v86
    %v88 = vand.u32 %v87, 4294901760
    %v89 = vsub.f32 %v87, %v88
    %v90 = vand.u32 %v89, 4294901760
    %91 = vmatmul.f32.gmra.mxu0 %v90
    %v92 = vpop.f32.mrf.mxu0
    %v93 = vadd.f32 %v56, %v92
    %94 = vdwg.mxu0
    %95 = vmatpush.msra.mxu0 0.0
    %96 = vmatpush.msra.mxu0 0.0
    %97 = vmatpush.msra.mxu0 0.0
    %98 = vmatpush.msra.mxu0 0.0
    %99 = vmatpush.msra.mxu0 0.0
    %100 = vmatpush.msra.mxu0 0.0
    %101 = vmatpush.msra.mxu0 0.0
    %102 = vmatpush.msra.mxu0 0.0
    %v103 = vand.u32 %v53, 4294901760
    %v104 = vsub.f32 %v53, %v103
    %v105 = vand.u32 %v104, 4294901760
    %v106 = vsub.f32 %v104, %v105
    %v107 = vand.u32 %v106, 4294901760
    %108 = vmatpush.msra.mxu0 %v107
    %v109 = vand.u32 %v52, 4294901760
    %v110 = vsub.f32 %v52, %v109
    %v111 = vand.u32 %v110, 4294901760
    %v112 = vsub.f32 %v110, %v111
    %v113 = vand.u32 %v112, 4294901760
    %114 = vmatpush.msra.mxu0 %v113
    %v115 = vand.u32 %v51, 4294901760
    %v116 = vsub.f32 %v51, %v115
    %v117 = vand.u32 %v116, 4294901760
    %v118 = vsub.f32 %v116, %v117
    %v119 = vand.u32 %v118, 4294901760
    %120 = vmatpush.msra.mxu0 %v119
    %v121 = vand.u32 %v50, 4294901760
    %v122 = vsub.f32 %v50, %v121
    %v123 = vand.u32 %v122, 4294901760
    %v124 = vsub.f32 %v122, %v123
    %v125 = vand.u32 %v124, 4294901760
    %126 = vmatpush.msra.mxu0 %v125
    %v127 = vand.u32 %v49, 4294901760
    %v128 = vsub.f32 %v49, %v127
    %v129 = vand.u32 %v128, 4294901760
    %v130 = vsub.f32 %v128, %v129
    %v131 = vand.u32 %v130, 4294901760
    %132 = vmatpush.msra.mxu0 %v131
    %v133 = vand.u32 %v48, 4294901760
    %v134 = vsub.f32 %v48, %v133
    %v135 = vand.u32 %v134, 4294901760
    %v136 = vsub.f32 %v134, %v135
    %v137 = vand.u32 %v136, 4294901760
    %138 = vmatpush.msra.mxu0 %v137
    %v139 = vand.u32 %v47, 4294901760
    %v140 = vsub.f32 %v47, %v139
    %v141 = vand.u32 %v140, 4294901760
    %v142 = vsub.f32 %v140, %v141
    %v143 = vand.u32 %v142, 4294901760
    %144 = vmatpush.msra.mxu0 %v143
    %v145 = vand.u32 %v46, 4294901760
    %v146 = vsub.f32 %v46, %v145
    %v147 = vand.u32 %v146, 4294901760
    %v148 = vsub.f32 %v146, %v147
    %v149 = vand.u32 %v148, 4294901760
    %150 = vmatpush.msra.mxu0 %v149
    %v151 = vand.u32 %v60, 4294901760
    %152 = vmatmul.f32.gmra.mxu0 %v151
    %v153 = vpop.f32.mrf.mxu0
    %v154 = vadd.f32 %v93, %v153
    %155 = vdwg.mxu0
    %156 = vmatpush.msra.mxu0 0.0
    %157 = vmatpush.msra.mxu0 0.0
    %158 = vmatpush.msra.mxu0 0.0
    %159 = vmatpush.msra.mxu0 0.0
    %160 = vmatpush.msra.mxu0 0.0
    %161 = vmatpush.msra.mxu0 0.0
    %162 = vmatpush.msra.mxu0 0.0
    %163 = vmatpush.msra.mxu0 0.0
    %v164 = vand.u32 %v53, 4294901760
    %v165 = vsub.f32 %v53, %v164
    %166 = vmatpush.msra.mxu0 %v165
    %v167 = vand.u32 %v52, 4294901760
    %v168 = vsub.f32 %v52, %v167
    %169 = vmatpush.msra.mxu0 %v168
    %v170 = vand.u32 %v51, 4294901760
    %v171 = vsub.f32 %v51, %v170
    %172 = vmatpush.msra.mxu0 %v171
    %v173 = vand.u32 %v50, 4294901760
    %v174 = vsub.f32 %v50, %v173
    %175 = vmatpush.msra.mxu0 %v174
    %v176 = vand.u32 %v49, 4294901760
    %v177 = vsub.f32 %v49, %v176
    %178 = vmatpush.msra.mxu0 %v177
    %v179 = vand.u32 %v48, 4294901760
    %v180 = vsub.f32 %v48, %v179
    %181 = vmatpush.msra.mxu0 %v180
    %v182 = vand.u32 %v47, 4294901760
    %v183 = vsub.f32 %v47, %v182
    %184 = vmatpush.msra.mxu0 %v183
    %v185 = vand.u32 %v46, 4294901760
    %v186 = vsub.f32 %v46, %v185
    %187 = vmatpush.msra.mxu0 %v186
    %v188 = vand.u32 %v60, 4294901760
    %v189 = vsub.f32 %v60, %v188
    %190 = vmatmul.f32.gmra.mxu0 %v189
    %v191 = vpop.f32.mrf.mxu0
    %v192 = vadd.f32 %v154, %v191
    %193 = vdwg.mxu0
    %194 = vmatpush.msra.mxu0 0.0
    %195 = vmatpush.msra.mxu0 0.0
    %196 = vmatpush.msra.mxu0 0.0
    %197 = vmatpush.msra.mxu0 0.0
    %198 = vmatpush.msra.mxu0 0.0
    %199 = vmatpush.msra.mxu0 0.0
    %200 = vmatpush.msra.mxu0 0.0
    %201 = vmatpush.msra.mxu0 0.0
    %v202 = vand.u32 %v53, 4294901760
    %203 = vmatpush.msra.mxu0 %v202
    %v204 = vand.u32 %v52, 4294901760
    %205 = vmatpush.msra.mxu0 %v204
    %v206 = vand.u32 %v51, 4294901760
    %207 = vmatpush.msra.mxu0 %v206
    %v208 = vand.u32 %v50, 4294901760
    %209 = vmatpush.msra.mxu0 %v208
    %v210 = vand.u32 %v49, 4294901760
    %211 = vmatpush.msra.mxu0 %v210
    %v212 = vand.u32 %v48, 4294901760
    %213 = vmatpush.msra.mxu0 %v212
    %v214 = vand.u32 %v47, 4294901760
    %215 = vmatpush.msra.mxu0 %v214
    %v216 = vand.u32 %v46, 4294901760
    %217 = vmatpush.msra.mxu0 %v216
    %v218 = vand.u32 %v60, 4294901760
    %v219 = vsub.f32 %v60, %v218
    %v220 = vand.u32 %v219, 4294901760
    %221 = vmatmul.f32.gmra.mxu0 %v220
    %v222 = vpop.f32.mrf.mxu0
    %v223 = vadd.f32 %v192, %v222
    %224 = vdwg.mxu0
    %225 = vmatpush.msra.mxu0 0.0
    %226 = vmatpush.msra.mxu0 0.0
    %227 = vmatpush.msra.mxu0 0.0
    %228 = vmatpush.msra.mxu0 0.0
    %229 = vmatpush.msra.mxu0 0.0
    %230 = vmatpush.msra.mxu0 0.0
    %231 = vmatpush.msra.mxu0 0.0
    %232 = vmatpush.msra.mxu0 0.0
    %v233 = vand.u32 %v53, 4294901760
    %v234 = vsub.f32 %v53, %v233
    %v235 = vand.u32 %v234, 4294901760
    %236 = vmatpush.msra.mxu0 %v235
    %v237 = vand.u32 %v52, 4294901760
    %v238 = vsub.f32 %v52, %v237
    %v239 = vand.u32 %v238, 4294901760
    %240 = vmatpush.msra.mxu0 %v239
    %v241 = vand.u32 %v51, 4294901760
    %v242 = vsub.f32 %v51, %v241
    %v243 = vand.u32 %v242, 4294901760
    %244 = vmatpush.msra.mxu0 %v243
    %v245 = vand.u32 %v50, 4294901760
    %v246 = vsub.f32 %v50, %v245
    %v247 = vand.u32 %v246, 4294901760
    %248 = vmatpush.msra.mxu0 %v247
    %v249 = vand.u32 %v49, 4294901760
    %v250 = vsub.f32 %v49, %v249
    %v251 = vand.u32 %v250, 4294901760
    %252 = vmatpush.msra.mxu0 %v251
    %v253 = vand.u32 %v48, 4294901760
    %v254 = vsub.f32 %v48, %v253
    %v255 = vand.u32 %v254, 4294901760
    %256 = vmatpush.msra.mxu0 %v255
    %v257 = vand.u32 %v47, 4294901760
    %v258 = vsub.f32 %v47, %v257
    %v259 = vand.u32 %v258, 4294901760
    %260 = vmatpush.msra.mxu0 %v259
    %v261 = vand.u32 %v46, 4294901760
    %v262 = vsub.f32 %v46, %v261
    %v263 = vand.u32 %v262, 4294901760
    %264 = vmatpush.msra.mxu0 %v263
    %v265 = vand.u32 %v60, 4294901760
    %266 = vmatmul.f32.gmra.mxu0 %v265
    %v267 = vpop.f32.mrf.mxu0
    %v268 = vadd.f32 %v223, %v267
    %269 = vdwg.mxu0
    %270 = vmatpush.msra.mxu0 0.0
    %271 = vmatpush.msra.mxu0 0.0
    %272 = vmatpush.msra.mxu0 0.0
    %273 = vmatpush.msra.mxu0 0.0
    %274 = vmatpush.msra.mxu0 0.0
    %275 = vmatpush.msra.mxu0 0.0
    %276 = vmatpush.msra.mxu0 0.0
    %277 = vmatpush.msra.mxu0 0.0
    %v278 = vand.u32 %v53, 4294901760
    %279 = vmatpush.msra.mxu0 %v278
    %v280 = vand.u32 %v52, 4294901760
    %281 = vmatpush.msra.mxu0 %v280
    %v282 = vand.u32 %v51, 4294901760
    %283 = vmatpush.msra.mxu0 %v282
    %v284 = vand.u32 %v50, 4294901760
    %285 = vmatpush.msra.mxu0 %v284
    %v286 = vand.u32 %v49, 4294901760
    %287 = vmatpush.msra.mxu0 %v286
    %v288 = vand.u32 %v48, 4294901760
    %289 = vmatpush.msra.mxu0 %v288
    %v290 = vand.u32 %v47, 4294901760
    %291 = vmatpush.msra.mxu0 %v290
    %v292 = vand.u32 %v46, 4294901760
    %293 = vmatpush.msra.mxu0 %v292
    %v294 = vand.u32 %v60, 4294901760
    %295 = vmatmul.f32.gmra.mxu0 %v294
    %v296 = vpop.f32.mrf.mxu0
    %v297 = vadd.f32 %v268, %v296
    %298 = vdwg.mxu0
    %299 = vst.msk [vmem:[#allocation7] sm:$0xff] %vm58, %v297
    // Predicated region
    $region22: #{tpu_custom_call.1} parent=1 // pred_check
      _
    $region23: #{tpu_custom_call.1} parent=1 // pred_check_branch
      %301 = sbr.rel (0) target = $region25
    $region24: #{tpu_custom_call.1} parent=1 // pred_region
      %303 = vsyncadd [#allocation4], 0
      %s305 = sshll.u32 [#allocation7], 4
      %s306 = int_to_ptr.vmem [resolvable:$true] %s305
      %s307 = sshll.u32 %s3, 4
      %s308 = int_to_ptr.hbm [resolvable:$true] %s307
      %310 = dma.vmem_to_hbm [thread:$0]  %s306, 128, %s308, [#allocation4]
    $region25: #{tpu_custom_call.1} parent=1 // pred_fallthru
      _
    // Predicated region
    $region26: #{tpu_custom_call.1} parent=1 // pred_check
      _
    $region27: #{tpu_custom_call.1} parent=1 // pred_check_branch
      %312 = sbr.rel (0) target = $region29
    $region28: #{tpu_custom_call.1} parent=1 // pred_region
      %314 = dma.done [#allocation4], 128
    $region29: #{tpu_custom_call.1} parent=1 // pred_fallthru
      _
    %315 = vsyncpa [#allocation3], 1
    %316 = vsyncpa [#allocation6], 1
    %317 = vsyncpa [#allocation4], 1

</llo_original>
